<compile_context>
chip_gen: v5e
topology: v5e:2x2
jax: 0.10.0
libtpu: 0.0.40
codegen_flags: <defaults>
</compile_context>

<pallas_src>
import jax
import jax.numpy as jnp
import numpy as np
from jax import lax
from jax.experimental import pallas as pl
from jax.experimental.pallas import tpu as pltpu


def _mrconv_kernel(x_ref, idx_i_ref, idx_j_ref, wx_ref, wj_ref, b_ref, o_ref):
    tb, c, n = x_ref.shape            # (TB, C, N)     bf16
    k = idx_i_ref.shape[1]            # (TB, K, N)     int32

    # 2-D iota over the gathered-source-node axis (sublanes); shared by every
    # batch / neighbor slot.  iota2[m, i] = m.
    iota2 = lax.broadcasted_iota(jnp.int32, (n, n), 0)

    wx = wx_ref[...]                  # (Cout, C) bf16  (x-part of 1x1 conv)
    wj = wj_ref[...]                  # (Cout, C) bf16  (xj-part of 1x1 conv)
    bias = b_ref[...]                 # (Cout, 1) f32

    for t in range(tb):               # TB is small & static -> unrolled
        x_cn = x_ref[t]               # (C, N) bf16 MXU operand (already bf16)
        idx_i_t = idx_i_ref[t]        # (K, N) centers
        idx_j_t = idx_j_ref[t]        # (K, N) neighbors

        xj_max = None
        for kk in range(k):
            row_i = idx_i_t[kk:kk + 1, :]                      # (1, N)
            row_j = idx_j_t[kk:kk + 1, :]                      # (1, N)
            # One-hot difference built directly in bf16 (exact for {-1,0,1}).
            # Note: out-of-range indices contribute 0 instead of erroring.
            sel = ((iota2 == row_j).astype(jnp.bfloat16)
                   - (iota2 == row_i).astype(jnp.bfloat16))    # (N, N) bf16
            # g[c, i] = x[c, idx_j[k,i]] - x[c, idx_i[k,i]]  (lane-dense in N)
            g = jnp.dot(x_cn, sel,
                        preferred_element_type=jnp.float32)    # (C, N) f32
            xj_max = g if xj_max is None else jnp.maximum(xj_max, g)

        # Fused 1x1 conv + bias + ReLU, channel-major, no concat:
        #   out = W_x @ x + W_j @ max_k(x_j - x_i) + b
        out = (jnp.dot(wx, x_cn, preferred_element_type=jnp.float32)
               + jnp.dot(wj, xj_max.astype(jnp.bfloat16),
                         preferred_element_type=jnp.float32)
               + bias)                                          # (Cout, N) f32
        o_ref[t] = jnp.maximum(out, 0.0).astype(o_ref.dtype)    # direct store


def mrconv2d_pallas(x_nchw, edge_index, conv_w, conv_b, *, tb=None):
    """x_nchw: (B, C, N, 1); edge_index: (2, B, N, K) int;
    conv_w: (Cout, 2C, 1, 1); conv_b: (Cout,).  Returns (B, Cout, N, 1) f32."""
    b, c, n, w1 = x_nchw.shape
    assert w1 == 1
    k = edge_index.shape[-1]
    assert k >= 1
    cout = conv_w.shape[0]

    # NCHW-native (B, C, N); DMA as bf16 (MXU operand dtype) -> half the input
    # HBM read and half the x double-buffer VMEM footprint.
    x_bcn = x_nchw[..., 0].astype(jnp.bfloat16)                        # (B, C, N)

    # Index tensors are tiny (B*N*K int32): the (B,N,K)->(B,K,N) transpose is
    # negligible HBM work and buys row-sliced, lane-oriented index broadcasts
    # in the kernel (no per-k sublane->lane relayouts).
    idx_i = jnp.transpose(edge_index[1], (0, 2, 1)).astype(jnp.int32)  # centers
    idx_j = jnp.transpose(edge_index[0], (0, 2, 1)).astype(jnp.int32)  # neighbors

    # PyTorch interleaves channels [x_0, xj_0, x_1, xj_1, ...]; split the 1x1
    # conv weight into its x-part and xj-part (avoids any lane-axis concat).
    wx = conv_w[:, 0::2, 0, 0].astype(jnp.bfloat16)                    # (Cout, C)
    wj = conv_w[:, 1::2, 0, 0].astype(jnp.bfloat16)                    # (Cout, C)
    bias = conv_b.reshape(cout, 1).astype(jnp.float32)                 # (Cout, 1)

    def footprint_bytes(tb_):
        blocks = 2 * (tb_ * c * n * 2          # x block (bf16), double-buffered
                      + 2 * tb_ * k * n * 4    # idx blocks (int32)
                      + tb_ * cout * n * 4)    # out block (f32)
        weights = 2 * (2 * cout * c * 2 + cout * 4)
        temps = 4 * n * n * 4 + 4 * c * n * 4 + 2 * cout * n * 4  # sel/g/out
        return blocks + weights + temps

    # Generation-aware VMEM budget (64 MiB/TC on v7x vs 128 MiB on v5e/v6e).
    try:
        vmem_cap = pltpu.get_tpu_info().vmem_capacity_bytes
    except Exception:
        vmem_cap = 64 * 1024 * 1024            # conservative fallback (v7x)
    vmem_budget = (vmem_cap * 3) // 4

    # tb heuristic: keep >= ~8 grid steps when B allows so BlockSpec
    # double-buffering overlaps DMA on both v7x TCs (and hides prologue /
    # epilogue DMA on single-TC v5e/v6e); otherwise tb = 1 maximizes steps.
    if tb is None:
        tb = 1
        for cand in range(b, 0, -1):
            if b % cand == 0 and b // cand >= 8 and footprint_bytes(cand) <= vmem_budget:
                tb = cand
                break
    assert b % tb == 0
    while tb > 1 and footprint_bytes(tb) > vmem_budget:
        tb = max(d for d in range(1, tb) if b % d == 0)

    vmem_limit = int(min(vmem_budget,
                         max(32 * 1024 * 1024, 2 * footprint_bytes(tb))))

    flops = 2 * b * k * n * n * c + 4 * b * cout * c * n
    bytes_accessed = (x_bcn.size * 2 + idx_i.size * 4 + idx_j.size * 4
                      + wx.size * 2 + wj.size * 2 + bias.size * 4
                      + b * cout * n * 4)
    cost = pl.CostEstimate(flops=flops, transcendentals=0,
                           bytes_accessed=bytes_accessed)

    out_bcn = pl.pallas_call(
        _mrconv_kernel,
        out_shape=jax.ShapeDtypeStruct((b, cout, n), jnp.float32),
        grid_spec=pltpu.PrefetchScalarGridSpec(
            num_scalar_prefetch=0,
            grid=(b // tb,),
            in_specs=[
                pl.BlockSpec((tb, c, n), lambda i: (i, 0, 0)),
                pl.BlockSpec((tb, k, n), lambda i: (i, 0, 0)),
                pl.BlockSpec((tb, k, n), lambda i: (i, 0, 0)),
                pl.BlockSpec((cout, c), lambda i: (0, 0)),
                pl.BlockSpec((cout, c), lambda i: (0, 0)),
                pl.BlockSpec((cout, 1), lambda i: (0, 0)),
            ],
            out_specs=pl.BlockSpec((tb, cout, n), lambda i: (i, 0, 0)),
        ),
        compiler_params=pltpu.CompilerParams(
            dimension_semantics=("parallel",),
            vmem_limit_bytes=vmem_limit),
        cost_estimate=cost,
    )(x_bcn, idx_i, idx_j, wx, wj, bias)

    # TODO(synk): for N >= ~512 replace the O(K*N^2) one-hot-matmul gather with
    # a scalar-prefetch / DMA row-gather and tile N in the grid.
    return out_bcn[..., None]                                          # (B, Cout, N, 1)


def mrconv2d_ref(x_nchw, edge_index, conv_w, conv_b):
    """Pure-JAX f32 reference mirroring the PyTorch forward exactly."""
    x = x_nchw[..., 0]                               # (B, C, N)

    def gather(xb, idxb):                            # xb (C, N), idxb (N, K)
        return xb[:, idxb]                           # (C, N, K)

    x_i = jax.vmap(gather)(x, edge_index[1])
    x_j = jax.vmap(gather)(x, edge_index[0])
    xj = jnp.max(x_j - x_i, axis=-1)                 # (B, C, N)
    b_, c_, n_ = x.shape
    feat = jnp.stack([x, xj], axis=2).reshape(b_, 2 * c_, n_)  # interleaved channels
    w2 = conv_w[:, :, 0, 0]                          # (Cout, 2C)
    out = jnp.einsum('oc,bcn->bon', w2, feat) + conv_b[None, :, None]
    return jnp.maximum(out, 0.0)[..., None]          # (B, Cout, N, 1)


if __name__ == "__main__":
    B, C, N, K, COUT = 4, 4, 16, 8, 8
    key = jax.random.PRNGKey(0)
    k1, k2, k3, k4 = jax.random.split(key, 4)

    x = jax.random.normal(k1, (B, C, N, 1), dtype=jnp.float32)
    edge_index = jax.random.randint(k2, (2, B, N, K), 0, N, dtype=jnp.int32)
    # Deterministic synthetic Conv2d(2C, COUT, 1, bias=True) parameters
    conv_w = jax.random.normal(k3, (COUT, 2 * C, 1, 1), dtype=jnp.float32) * 0.1
    conv_b = jax.random.normal(k4, (COUT,), dtype=jnp.float32) * 0.1

    out = jax.block_until_ready(mrconv2d_pallas(x, edge_index, conv_w, conv_b))
    ref = mrconv2d_ref(x, edge_index, conv_w, conv_b)

    assert out.shape == (B, COUT, N, 1)
    # bf16 MXU operands (x, weights) -> tolerance loosened vs the f32 reference.
    np.testing.assert_allclose(np.asarray(out), np.asarray(ref), rtol=3e-2, atol=3e-2)
    print("KERNEL_OK")
</pallas_src>

<mosaic_0001>
module attributes {stable_mosaic.version = 11 : i64} {
  func.func @_mrconv_kernel(%arg0: i32, %arg1: memref<1x4x16xbf16, #tpu.memory_space<vmem>>, %arg2: memref<1x8x16xi32, #tpu.memory_space<vmem>>, %arg3: memref<1x8x16xi32, #tpu.memory_space<vmem>>, %arg4: memref<8x4xbf16, #tpu.memory_space<vmem>>, %arg5: memref<8x4xbf16, #tpu.memory_space<vmem>>, %arg6: memref<8x1xf32, #tpu.memory_space<vmem>>, %arg7: memref<1x8x16xf32, #tpu.memory_space<vmem>>) attributes {dimension_semantics = [#tpu.dimension_semantics<parallel>], iteration_bounds = array<i64: 4>, scalar_prefetch = 0 : i64, scratch_operands = 0 : i64, tpu.core_type = #tpu.core_type<tc>, window_params = [{transform_indices = @transform_0, window_bounds = array<i64: 1, 4, 16>}, {transform_indices = @transform_1, window_bounds = array<i64: 1, 8, 16>}, {transform_indices = @transform_2, window_bounds = array<i64: 1, 8, 16>}, {pipeline_mode = #tpu.pipeline_mode<synchronous>, transform_indices = @transform_3, window_bounds = array<i64: 8, 4>}, {pipeline_mode = #tpu.pipeline_mode<synchronous>, transform_indices = @transform_4, window_bounds = array<i64: 8, 4>}, {pipeline_mode = #tpu.pipeline_mode<synchronous>, transform_indices = @transform_5, window_bounds = array<i64: 8, 1>}, {transform_indices = @transform_6, window_bounds = array<i64: 1, 8, 16>}]} {
    %0 = tpu.iota {dimensions = array<i32: 0>} : vector<16x16xi32>
    %c0 = arith.constant 0 : index
    %c0_0 = arith.constant 0 : index
    %1 = vector.load %arg4[%c0, %c0_0] : memref<8x4xbf16, #tpu.memory_space<vmem>>, vector<8x4xbf16>
    %c0_1 = arith.constant 0 : index
    %c0_2 = arith.constant 0 : index
    %2 = vector.load %arg5[%c0_1, %c0_2] : memref<8x4xbf16, #tpu.memory_space<vmem>>, vector<8x4xbf16>
    %c0_3 = arith.constant 0 : index
    %c0_4 = arith.constant 0 : index
    %3 = vector.load %arg6[%c0_3, %c0_4] : memref<8x1xf32, #tpu.memory_space<vmem>>, vector<8x1xf32>
    %c0_5 = arith.constant 0 : index
    %c0_6 = arith.constant 0 : index
    %c0_7 = arith.constant 0 : index
    %4 = vector.load %arg1[%c0_5, %c0_6, %c0_7] : memref<1x4x16xbf16, #tpu.memory_space<vmem>>, vector<1x4x16xbf16>
    %5 = vector.shape_cast %4 : vector<1x4x16xbf16> to vector<4x16xbf16>
    %c0_8 = arith.constant 0 : index
    %c0_9 = arith.constant 0 : index
    %c0_10 = arith.constant 0 : index
    %6 = vector.load %arg2[%c0_8, %c0_9, %c0_10] : memref<1x8x16xi32, #tpu.memory_space<vmem>>, vector<1x8x16xi32>
    %7 = vector.shape_cast %6 : vector<1x8x16xi32> to vector<8x16xi32>
    %c0_11 = arith.constant 0 : index
    %c0_12 = arith.constant 0 : index
    %c0_13 = arith.constant 0 : index
    %8 = vector.load %arg3[%c0_11, %c0_12, %c0_13] : memref<1x8x16xi32, #tpu.memory_space<vmem>>, vector<1x8x16xi32>
    %9 = vector.shape_cast %8 : vector<1x8x16xi32> to vector<8x16xi32>
    %10 = vector.extract_strided_slice %7 {offsets = [0, 0], sizes = [1, 16], strides = [1, 1]} : vector<8x16xi32> to vector<1x16xi32>
    %11 = vector.extract_strided_slice %9 {offsets = [0, 0], sizes = [1, 16], strides = [1, 1]} : vector<8x16xi32> to vector<1x16xi32>
    %12 = vector.broadcast %11 : vector<1x16xi32> to vector<16x16xi32>
    %13 = arith.cmpi eq, %0, %12 : vector<16x16xi32>
    %14 = arith.extui %13 : vector<16x16xi1> to vector<16x16xi32>
    %15 = arith.sitofp %14 : vector<16x16xi32> to vector<16x16xf32>
    %16 = arith.truncf %15 : vector<16x16xf32> to vector<16x16xbf16>
    %17 = vector.broadcast %10 : vector<1x16xi32> to vector<16x16xi32>
    %18 = arith.cmpi eq, %0, %17 : vector<16x16xi32>
    %19 = arith.extui %18 : vector<16x16xi1> to vector<16x16xi32>
    %20 = arith.sitofp %19 : vector<16x16xi32> to vector<16x16xf32>
    %21 = arith.truncf %20 : vector<16x16xf32> to vector<16x16xbf16>
    %22 = arith.subf %16, %21 : vector<16x16xbf16>
    %cst = arith.constant dense<0.000000e+00> : vector<4x16xf32>
    %23 = tpu.matmul %5, %22, %cst {dimension_numbers = #tpu.dot_dimension_numbers<[1], [0], [0], [1], [0, 0, 1, 1], [], []>} : vector<4x16xbf16>, vector<16x16xbf16>, vector<4x16xf32> -> vector<4x16xf32>
    %24 = vector.extract_strided_slice %7 {offsets = [1, 0], sizes = [1, 16], strides = [1, 1]} : vector<8x16xi32> to vector<1x16xi32>
    %25 = vector.extract_strided_slice %9 {offsets = [1, 0], sizes = [1, 16], strides = [1, 1]} : vector<8x16xi32> to vector<1x16xi32>
    %26 = vector.broadcast %25 : vector<1x16xi32> to vector<16x16xi32>
    %27 = arith.cmpi eq, %0, %26 : vector<16x16xi32>
    %28 = arith.extui %27 : vector<16x16xi1> to vector<16x16xi32>
    %29 = arith.sitofp %28 : vector<16x16xi32> to vector<16x16xf32>
    %30 = arith.truncf %29 : vector<16x16xf32> to vector<16x16xbf16>
    %31 = vector.broadcast %24 : vector<1x16xi32> to vector<16x16xi32>
    %32 = arith.cmpi eq, %0, %31 : vector<16x16xi32>
    %33 = arith.extui %32 : vector<16x16xi1> to vector<16x16xi32>
    %34 = arith.sitofp %33 : vector<16x16xi32> to vector<16x16xf32>
    %35 = arith.truncf %34 : vector<16x16xf32> to vector<16x16xbf16>
    %36 = arith.subf %30, %35 : vector<16x16xbf16>
    %cst_14 = arith.constant dense<0.000000e+00> : vector<4x16xf32>
    %37 = tpu.matmul %5, %36, %cst_14 {dimension_numbers = #tpu.dot_dimension_numbers<[1], [0], [0], [1], [0, 0, 1, 1], [], []>} : vector<4x16xbf16>, vector<16x16xbf16>, vector<4x16xf32> -> vector<4x16xf32>
    %38 = arith.maximumf %23, %37 : vector<4x16xf32>
    %39 = vector.extract_strided_slice %7 {offsets = [2, 0], sizes = [1, 16], strides = [1, 1]} : vector<8x16xi32> to vector<1x16xi32>
    %40 = vector.extract_strided_slice %9 {offsets = [2, 0], sizes = [1, 16], strides = [1, 1]} : vector<8x16xi32> to vector<1x16xi32>
    %41 = vector.broadcast %40 : vector<1x16xi32> to vector<16x16xi32>
    %42 = arith.cmpi eq, %0, %41 : vector<16x16xi32>
    %43 = arith.extui %42 : vector<16x16xi1> to vector<16x16xi32>
    %44 = arith.sitofp %43 : vector<16x16xi32> to vector<16x16xf32>
    %45 = arith.truncf %44 : vector<16x16xf32> to vector<16x16xbf16>
    %46 = vector.broadcast %39 : vector<1x16xi32> to vector<16x16xi32>
    %47 = arith.cmpi eq, %0, %46 : vector<16x16xi32>
    %48 = arith.extui %47 : vector<16x16xi1> to vector<16x16xi32>
    %49 = arith.sitofp %48 : vector<16x16xi32> to vector<16x16xf32>
    %50 = arith.truncf %49 : vector<16x16xf32> to vector<16x16xbf16>
    %51 = arith.subf %45, %50 : vector<16x16xbf16>
    %cst_15 = arith.constant dense<0.000000e+00> : vector<4x16xf32>
    %52 = tpu.matmul %5, %51, %cst_15 {dimension_numbers = #tpu.dot_dimension_numbers<[1], [0], [0], [1], [0, 0, 1, 1], [], []>} : vector<4x16xbf16>, vector<16x16xbf16>, vector<4x16xf32> -> vector<4x16xf32>
    %53 = arith.maximumf %38, %52 : vector<4x16xf32>
    %54 = vector.extract_strided_slice %7 {offsets = [3, 0], sizes = [1, 16], strides = [1, 1]} : vector<8x16xi32> to vector<1x16xi32>
    %55 = vector.extract_strided_slice %9 {offsets = [3, 0], sizes = [1, 16], strides = [1, 1]} : vector<8x16xi32> to vector<1x16xi32>
    %56 = vector.broadcast %55 : vector<1x16xi32> to vector<16x16xi32>
    %57 = arith.cmpi eq, %0, %56 : vector<16x16xi32>
    %58 = arith.extui %57 : vector<16x16xi1> to vector<16x16xi32>
    %59 = arith.sitofp %58 : vector<16x16xi32> to vector<16x16xf32>
    %60 = arith.truncf %59 : vector<16x16xf32> to vector<16x16xbf16>
    %61 = vector.broadcast %54 : vector<1x16xi32> to vector<16x16xi32>
    %62 = arith.cmpi eq, %0, %61 : vector<16x16xi32>
    %63 = arith.extui %62 : vector<16x16xi1> to vector<16x16xi32>
    %64 = arith.sitofp %63 : vector<16x16xi32> to vector<16x16xf32>
    %65 = arith.truncf %64 : vector<16x16xf32> to vector<16x16xbf16>
    %66 = arith.subf %60, %65 : vector<16x16xbf16>
    %cst_16 = arith.constant dense<0.000000e+00> : vector<4x16xf32>
    %67 = tpu.matmul %5, %66, %cst_16 {dimension_numbers = #tpu.dot_dimension_numbers<[1], [0], [0], [1], [0, 0, 1, 1], [], []>} : vector<4x16xbf16>, vector<16x16xbf16>, vector<4x16xf32> -> vector<4x16xf32>
    %68 = arith.maximumf %53, %67 : vector<4x16xf32>
    %69 = vector.extract_strided_slice %7 {offsets = [4, 0], sizes = [1, 16], strides = [1, 1]} : vector<8x16xi32> to vector<1x16xi32>
    %70 = vector.extract_strided_slice %9 {offsets = [4, 0], sizes = [1, 16], strides = [1, 1]} : vector<8x16xi32> to vector<1x16xi32>
    %71 = vector.broadcast %70 : vector<1x16xi32> to vector<16x16xi32>
    %72 = arith.cmpi eq, %0, %71 : vector<16x16xi32>
    %73 = arith.extui %72 : vector<16x16xi1> to vector<16x16xi32>
    %74 = arith.sitofp %73 : vector<16x16xi32> to vector<16x16xf32>
    %75 = arith.truncf %74 : vector<16x16xf32> to vector<16x16xbf16>
    %76 = vector.broadcast %69 : vector<1x16xi32> to vector<16x16xi32>
    %77 = arith.cmpi eq, %0, %76 : vector<16x16xi32>
    %78 = arith.extui %77 : vector<16x16xi1> to vector<16x16xi32>
    %79 = arith.sitofp %78 : vector<16x16xi32> to vector<16x16xf32>
    %80 = arith.truncf %79 : vector<16x16xf32> to vector<16x16xbf16>
    %81 = arith.subf %75, %80 : vector<16x16xbf16>
    %cst_17 = arith.constant dense<0.000000e+00> : vector<4x16xf32>
    %82 = tpu.matmul %5, %81, %cst_17 {dimension_numbers = #tpu.dot_dimension_numbers<[1], [0], [0], [1], [0, 0, 1, 1], [], []>} : vector<4x16xbf16>, vector<16x16xbf16>, vector<4x16xf32> -> vector<4x16xf32>
    %83 = arith.maximumf %68, %82 : vector<4x16xf32>
    %84 = vector.extract_strided_slice %7 {offsets = [5, 0], sizes = [1, 16], strides = [1, 1]} : vector<8x16xi32> to vector<1x16xi32>
    %85 = vector.extract_strided_slice %9 {offsets = [5, 0], sizes = [1, 16], strides = [1, 1]} : vector<8x16xi32> to vector<1x16xi32>
    %86 = vector.broadcast %85 : vector<1x16xi32> to vector<16x16xi32>
    %87 = arith.cmpi eq, %0, %86 : vector<16x16xi32>
    %88 = arith.extui %87 : vector<16x16xi1> to vector<16x16xi32>
    %89 = arith.sitofp %88 : vector<16x16xi32> to vector<16x16xf32>
    %90 = arith.truncf %89 : vector<16x16xf32> to vector<16x16xbf16>
    %91 = vector.broadcast %84 : vector<1x16xi32> to vector<16x16xi32>
    %92 = arith.cmpi eq, %0, %91 : vector<16x16xi32>
    %93 = arith.extui %92 : vector<16x16xi1> to vector<16x16xi32>
    %94 = arith.sitofp %93 : vector<16x16xi32> to vector<16x16xf32>
    %95 = arith.truncf %94 : vector<16x16xf32> to vector<16x16xbf16>
    %96 = arith.subf %90, %95 : vector<16x16xbf16>
    %cst_18 = arith.constant dense<0.000000e+00> : vector<4x16xf32>
    %97 = tpu.matmul %5, %96, %cst_18 {dimension_numbers = #tpu.dot_dimension_numbers<[1], [0], [0], [1], [0, 0, 1, 1], [], []>} : vector<4x16xbf16>, vector<16x16xbf16>, vector<4x16xf32> -> vector<4x16xf32>
    %98 = arith.maximumf %83, %97 : vector<4x16xf32>
    %99 = vector.extract_strided_slice %7 {offsets = [6, 0], sizes = [1, 16], strides = [1, 1]} : vector<8x16xi32> to vector<1x16xi32>
    %100 = vector.extract_strided_slice %9 {offsets = [6, 0], sizes = [1, 16], strides = [1, 1]} : vector<8x16xi32> to vector<1x16xi32>
    %101 = vector.broadcast %100 : vector<1x16xi32> to vector<16x16xi32>
    %102 = arith.cmpi eq, %0, %101 : vector<16x16xi32>
    %103 = arith.extui %102 : vector<16x16xi1> to vector<16x16xi32>
    %104 = arith.sitofp %103 : vector<16x16xi32> to vector<16x16xf32>
    %105 = arith.truncf %104 : vector<16x16xf32> to vector<16x16xbf16>
    %106 = vector.broadcast %99 : vector<1x16xi32> to vector<16x16xi32>
    %107 = arith.cmpi eq, %0, %106 : vector<16x16xi32>
    %108 = arith.extui %107 : vector<16x16xi1> to vector<16x16xi32>
    %109 = arith.sitofp %108 : vector<16x16xi32> to vector<16x16xf32>
    %110 = arith.truncf %109 : vector<16x16xf32> to vector<16x16xbf16>
    %111 = arith.subf %105, %110 : vector<16x16xbf16>
    %cst_19 = arith.constant dense<0.000000e+00> : vector<4x16xf32>
    %112 = tpu.matmul %5, %111, %cst_19 {dimension_numbers = #tpu.dot_dimension_numbers<[1], [0], [0], [1], [0, 0, 1, 1], [], []>} : vector<4x16xbf16>, vector<16x16xbf16>, vector<4x16xf32> -> vector<4x16xf32>
    %113 = arith.maximumf %98, %112 : vector<4x16xf32>
    %114 = vector.extract_strided_slice %7 {offsets = [7, 0], sizes = [1, 16], strides = [1, 1]} : vector<8x16xi32> to vector<1x16xi32>
    %115 = vector.extract_strided_slice %9 {offsets = [7, 0], sizes = [1, 16], strides = [1, 1]} : vector<8x16xi32> to vector<1x16xi32>
    %116 = vector.broadcast %115 : vector<1x16xi32> to vector<16x16xi32>
    %117 = arith.cmpi eq, %0, %116 : vector<16x16xi32>
    %118 = arith.extui %117 : vector<16x16xi1> to vector<16x16xi32>
    %119 = arith.sitofp %118 : vector<16x16xi32> to vector<16x16xf32>
    %120 = arith.truncf %119 : vector<16x16xf32> to vector<16x16xbf16>
    %121 = vector.broadcast %114 : vector<1x16xi32> to vector<16x16xi32>
    %122 = arith.cmpi eq, %0, %121 : vector<16x16xi32>
    %123 = arith.extui %122 : vector<16x16xi1> to vector<16x16xi32>
    %124 = arith.sitofp %123 : vector<16x16xi32> to vector<16x16xf32>
    %125 = arith.truncf %124 : vector<16x16xf32> to vector<16x16xbf16>
    %126 = arith.subf %120, %125 : vector<16x16xbf16>
    %cst_20 = arith.constant dense<0.000000e+00> : vector<4x16xf32>
    %127 = tpu.matmul %5, %126, %cst_20 {dimension_numbers = #tpu.dot_dimension_numbers<[1], [0], [0], [1], [0, 0, 1, 1], [], []>} : vector<4x16xbf16>, vector<16x16xbf16>, vector<4x16xf32> -> vector<4x16xf32>
    %128 = arith.maximumf %113, %127 : vector<4x16xf32>
    %cst_21 = arith.constant dense<0.000000e+00> : vector<8x16xf32>
    %129 = tpu.matmul %1, %5, %cst_21 {dimension_numbers = #tpu.dot_dimension_numbers<[1], [0], [0], [1], [0, 0, 1, 1], [], []>} : vector<8x4xbf16>, vector<4x16xbf16>, vector<8x16xf32> -> vector<8x16xf32>
    %130 = arith.truncf %128 : vector<4x16xf32> to vector<4x16xbf16>
    %cst_22 = arith.constant dense<0.000000e+00> : vector<8x16xf32>
    %131 = tpu.matmul %2, %130, %cst_22 {dimension_numbers = #tpu.dot_dimension_numbers<[1], [0], [0], [1], [0, 0, 1, 1], [], []>} : vector<8x4xbf16>, vector<4x16xbf16>, vector<8x16xf32> -> vector<8x16xf32>
    %132 = arith.addf %129, %131 : vector<8x16xf32>
    %133 = vector.broadcast %3 : vector<8x1xf32> to vector<8x16xf32>
    %134 = arith.addf %132, %133 : vector<8x16xf32>
    %cst_23 = arith.constant 0.000000e+00 : f32
    %135 = vector.broadcast %cst_23 : f32 to vector<8x16xf32>
    %136 = arith.maximumf %134, %135 : vector<8x16xf32>
    %c0_24 = arith.constant 0 : index
    %c0_25 = arith.constant 0 : index
    %c0_26 = arith.constant 0 : index
    %137 = vector.load %arg7[%c0_24, %c0_25, %c0_26] : memref<1x8x16xf32, #tpu.memory_space<vmem>>, vector<1x8x16xf32>
    %138 = vector.shape_cast %137 : vector<1x8x16xf32> to vector<8x16xf32>
    %139 = vector.shape_cast %136 : vector<8x16xf32> to vector<1x8x16xf32>
    tpu.vector_store %arg7[%c0_24, %c0_25, %c0_26], %139 {strides = array<i32>} : memref<1x8x16xf32, #tpu.memory_space<vmem>>, vector<1x8x16xf32>,
    return
  }
  func.func @transform_0(%arg0: i32) -> (i32, i32, i32) {
    %c0_i32 = arith.constant 0 : i32
    %c0_i32_0 = arith.constant 0 : i32
    %c0_i32_1 = arith.constant 0 : i32
    return %arg0, %c0_i32, %c0_i32_0 : i32, i32, i32
  }
  func.func @transform_1(%arg0: i32) -> (i32, i32, i32) {
    %c0_i32 = arith.constant 0 : i32
    %c0_i32_0 = arith.constant 0 : i32
    %c0_i32_1 = arith.constant 0 : i32
    return %arg0, %c0_i32, %c0_i32_0 : i32, i32, i32
  }
  func.func @transform_2(%arg0: i32) -> (i32, i32, i32) {
    %c0_i32 = arith.constant 0 : i32
    %c0_i32_0 = arith.constant 0 : i32
    %c0_i32_1 = arith.constant 0 : i32
    return %arg0, %c0_i32, %c0_i32_0 : i32, i32, i32
  }
  func.func @transform_3(%arg0: i32) -> (i32, i32) {
    %c0_i32 = arith.constant 0 : i32
    %c0_i32_0 = arith.constant 0 : i32
    %c0_i32_1 = arith.constant 0 : i32
    return %c0_i32, %c0_i32_0 : i32, i32
  }
  func.func @transform_4(%arg0: i32) -> (i32, i32) {
    %c0_i32 = arith.constant 0 : i32
    %c0_i32_0 = arith.constant 0 : i32
    %c0_i32_1 = arith.constant 0 : i32
    return %c0_i32, %c0_i32_0 : i32, i32
  }
  func.func @transform_5(%arg0: i32) -> (i32, i32) {
    %c0_i32 = arith.constant 0 : i32
    %c0_i32_0 = arith.constant 0 : i32
    %c0_i32_1 = arith.constant 0 : i32
    return %c0_i32, %c0_i32_0 : i32, i32
  }
  func.func @transform_6(%arg0: i32) -> (i32, i32, i32) {
    %c0_i32 = arith.constant 0 : i32
    %c0_i32_0 = arith.constant 0 : i32
    %c0_i32_1 = arith.constant 0 : i32
    return %arg0, %c0_i32, %c0_i32_0 : i32, i32, i32
  }
}

</mosaic_0001>

<llo_original>
// kernel: tpu_custom_call.1
$region0: #{tpu_custom_call.1}
  #allocation0 [shape = 'u32[]', space=smem, size = 0x4, offset = 0x4, fixed_abs, tag = 'smem constant byte address 0x4 - core index']
  #allocation1 [shape = 'u32[72,128]{1,0:T(1,128)}', space=vmem, size = 0x9000, scoped, tag = 'internal scratch']
  %s0 = inlined_call_operand.vmem [shape: bf16[4,4,16], index: 0, kind: input, shape index: {}]
  %s1 = inlined_call_operand.hbm [shape: s32[4,8,16], index: 1, kind: input, shape index: {}]
  %s2 = inlined_call_operand.hbm [shape: s32[4,8,16], index: 2, kind: input, shape index: {}]
  %s3 = inlined_call_operand.vmem [shape: bf16[8,4], index: 3, kind: input, shape index: {}]
  %s4 = inlined_call_operand.vmem [shape: bf16[8,4], index: 4, kind: input, shape index: {}]
  %s5 = inlined_call_operand.vmem [shape: f32[8,1], index: 5, kind: input, shape index: {}]
  %s6 = inlined_call_operand.hbm [shape: f32[4,8,16], index: 6, kind: output, shape index: {}]
  %s7 = sld [smem:[#allocation0]]
  $region65: #{tpu_custom_call.1} parent=0
    _
  %s9 = ssub.s32 1, %s7
  %s10 = scalar_select 0, %s9, %s7
  $region1: #{tpu_custom_call.1} parent=0
    #allocation2 [shape = 'u8[8192]{0}', space=vmem, size = 0x2000, scoped, tag = 'input window, operand 1']
    #allocation3 [shape = 's32[2]{0}', space=sflag, size = 0x8, scoped, tag = 'scoped memory for tpu_custom_call.1']
    #allocation4 [shape = 's32[2]{0}', space=sflag, size = 0x8, scoped, tag = 'scoped memory for tpu_custom_call.1']
    #allocation5 [shape = 'u8[8192]{0}', space=vmem, size = 0x2000, scoped, tag = 'input window, operand 2']
    #allocation6 [shape = 's32[2]{0}', space=sflag, size = 0x8, scoped, tag = 'scoped memory for tpu_custom_call.1']
    #allocation7 [shape = 'u8[8192]{0}', space=vmem, size = 0x2000, scoped, tag = 'output window, operand 0']
    %11 = vsyncpa [#allocation3], 0
    %s12 = scalar_lea.sflag [#allocation3], 1
    %13 = vsyncpa %s12, 0
    %14 = vsyncpa [#allocation6], 0
    %s15 = scalar_lea.sflag [#allocation6], 1
    %16 = vsyncpa %s15, 0
    %17 = vsyncpa [#allocation4], 0
    %s18 = scalar_lea.sflag [#allocation4], 1
    %19 = vsyncpa %s18, 0
    loop: start=0, step=1, limit=6
    $region2: #{tpu_custom_call.1} parent=1 // loop_pre_header
      _
    $region3: #{tpu_custom_call.1} parent=1 // loop_header
      %s21 = sphi 0, %s25
      %p22 = scmp.ge.s32.totalorder %s21, 6
      %s31 = sphi 0, %s33
      %s34 = sphi 0, %s31
      %s35 = sphi 0, %s34
      %s51 = sphi 0, %s35
      %s57 = sphi 0, %s59
      %s60 = sphi 0, %s57
      %s61 = sphi 0, %s60
      %s77 = sphi 0, %s61
      %s83 = sphi 0, %s85
      %s86 = sphi 0, %s83
      %s87 = sphi 0, %s86
      %s103 = sphi 0, %s87
      %s107 = sphi 0, %s107
      %s109 = sphi 0, %s107
      %s110 = sphi 0, %s109
      %s124 = sphi 0, %s110
      %s128 = sphi 0, %s128
      %s130 = sphi 0, %s128
      %s131 = sphi 0, %s130
      %s145 = sphi 0, %s131
      %s149 = sphi 0, %s149
      %s151 = sphi 0, %s149
      %s152 = sphi 0, %s151
      %s166 = sphi 0, %s152
      %s172 = sphi 0, %s174
      %s175 = sphi 0, %s172
      %s176 = sphi 0, %s175
      %s192 = sphi 0, %s176
    $region4: #{tpu_custom_call.1} parent=1 // loop_header_branch
      %24 = sbr.rel (%p22) target = $region8
    $region5: #{tpu_custom_call.1} parent=1 // loop_body
      %s26 = ssub.s32 %s21, 1
      %s27 = ssub.s32 %s21, 2
      %s28 = sadd.s32 %s21, 1
      %s29 = ssub.s32 %s21, %s28
      %p30 = scmp.eq.s32.totalorder %s29, 0
      %s32 = sadd.s32 %s31, 1
      %s33 = scalar_select %p30, %s31, %s32
      %p36 = pneg %p30
      %p37 = scmp.eq.s32.totalorder %s21, 3
      %p38 = por %p36, %p37
      %p39 = scmp.ne.s32.totalorder %s31, %s34
      %p40 = scmp.eq.s32.totalorder %s21, 0
      %p41 = por %p39, %p40
      %p42 = scmp.ne.s32.totalorder %s31, %s34
      %p43 = scmp.eq.s32.totalorder %s26, 3
      %p44 = por %p42, %p43
      %p45 = scmp.ne.s32.totalorder %s34, %s35
      %p46 = scmp.eq.s32.totalorder %s26, 0
      %p47 = por %p45, %p46
      %p48 = scmp.ne.s32.totalorder %s34, %s35
      %p49 = scmp.eq.s32.totalorder %s27, 3
      %p50 = por %p48, %p49
      %p52 = scmp.ne.s32.totalorder %s35, %s51
      %p53 = scmp.eq.s32.totalorder %s27, 0
      %p54 = por %p52, %p53
      %s55 = ssub.s32 %s21, %s28
      %p56 = scmp.eq.s32.totalorder %s55, 0
      %s58 = sadd.s32 %s57, 1
      %s59 = scalar_select %p56, %s57, %s58
      %p62 = pneg %p56
      %p63 = scmp.eq.s32.totalorder %s21, 3
      %p64 = por %p62, %p63
      %p65 = scmp.ne.s32.totalorder %s57, %s60
      %p66 = scmp.eq.s32.totalorder %s21, 0
      %p67 = por %p65, %p66
      %p68 = scmp.ne.s32.totalorder %s57, %s60
      %p69 = scmp.eq.s32.totalorder %s26, 3
      %p70 = por %p68, %p69
      %p71 = scmp.ne.s32.totalorder %s60, %s61
      %p72 = scmp.eq.s32.totalorder %s26, 0
      %p73 = por %p71, %p72
      %p74 = scmp.ne.s32.totalorder %s60, %s61
      %p75 = scmp.eq.s32.totalorder %s27, 3
      %p76 = por %p74, %p75
      %p78 = scmp.ne.s32.totalorder %s61, %s77
      %p79 = scmp.eq.s32.totalorder %s27, 0
      %p80 = por %p78, %p79
      %s81 = ssub.s32 %s21, %s28
      %p82 = scmp.eq.s32.totalorder %s81, 0
      %s84 = sadd.s32 %s83, 1
      %s85 = scalar_select %p82, %s83, %s84
      %p88 = pneg %p82
      %p89 = scmp.eq.s32.totalorder %s21, 3
      %p90 = por %p88, %p89
      %p91 = scmp.ne.s32.totalorder %s83, %s86
      %p92 = scmp.eq.s32.totalorder %s21, 0
      %p93 = por %p91, %p92
      %p94 = scmp.ne.s32.totalorder %s83, %s86
      %p95 = scmp.eq.s32.totalorder %s26, 3
      %p96 = por %p94, %p95
      %p97 = scmp.ne.s32.totalorder %s86, %s87
      %p98 = scmp.eq.s32.totalorder %s26, 0
      %p99 = por %p97, %p98
      %p100 = scmp.ne.s32.totalorder %s86, %s87
      %p101 = scmp.eq.s32.totalorder %s27, 3
      %p102 = por %p100, %p101
      %p104 = scmp.ne.s32.totalorder %s87, %s103
      %p105 = scmp.eq.s32.totalorder %s27, 0
      %p106 = por %p104, %p105
      %s108 = sadd.s32 %s107, 1
      %p111 = scmp.eq.s32.totalorder %s21, 3
      %p112 = scmp.ne.s32.totalorder %s107, %s109
      %p113 = scmp.eq.s32.totalorder %s21, 0
      %p114 = por %p112, %p113
      %p115 = scmp.ne.s32.totalorder %s107, %s109
      %p116 = scmp.eq.s32.totalorder %s26, 3
      %p117 = por %p115, %p116
      %p118 = scmp.ne.s32.totalorder %s109, %s110
      %p119 = scmp.eq.s32.totalorder %s26, 0
      %p120 = por %p118, %p119
      %p121 = scmp.ne.s32.totalorder %s109, %s110
      %p122 = scmp.eq.s32.totalorder %s27, 3
      %p123 = por %p121, %p122
      %p125 = scmp.ne.s32.totalorder %s110, %s124
      %p126 = scmp.eq.s32.totalorder %s27, 0
      %p127 = por %p125, %p126
      %s129 = sadd.s32 %s128, 1
      %p132 = scmp.eq.s32.totalorder %s21, 3
      %p133 = scmp.ne.s32.totalorder %s128, %s130
      %p134 = scmp.eq.s32.totalorder %s21, 0
      %p135 = por %p133, %p134
      %p136 = scmp.ne.s32.totalorder %s128, %s130
      %p137 = scmp.eq.s32.totalorder %s26, 3
      %p138 = por %p136, %p137
      %p139 = scmp.ne.s32.totalorder %s130, %s131
      %p140 = scmp.eq.s32.totalorder %s26, 0
      %p141 = por %p139, %p140
      %p142 = scmp.ne.s32.totalorder %s130, %s131
      %p143 = scmp.eq.s32.totalorder %s27, 3
      %p144 = por %p142, %p143
      %p146 = scmp.ne.s32.totalorder %s131, %s145
      %p147 = scmp.eq.s32.totalorder %s27, 0
      %p148 = por %p146, %p147
      %s150 = sadd.s32 %s149, 1
      %p153 = scmp.eq.s32.totalorder %s21, 3
      %p154 = scmp.ne.s32.totalorder %s149, %s151
      %p155 = scmp.eq.s32.totalorder %s21, 0
      %p156 = por %p154, %p155
      %p157 = scmp.ne.s32.totalorder %s149, %s151
      %p158 = scmp.eq.s32.totalorder %s26, 3
      %p159 = por %p157, %p158
      %p160 = scmp.ne.s32.totalorder %s151, %s152
      %p161 = scmp.eq.s32.totalorder %s26, 0
      %p162 = por %p160, %p161
      %p163 = scmp.ne.s32.totalorder %s151, %s152
      %p164 = scmp.eq.s32.totalorder %s27, 3
      %p165 = por %p163, %p164
      %p167 = scmp.ne.s32.totalorder %s152, %s166
      %p168 = scmp.eq.s32.totalorder %s27, 0
      %p169 = por %p167, %p168
      %s170 = ssub.s32 %s21, %s28
      %p171 = scmp.eq.s32.totalorder %s170, 0
      %s173 = sadd.s32 %s172, 1
      %s174 = scalar_select %p171, %s172, %s173
      %p177 = pneg %p171
      %p178 = scmp.eq.s32.totalorder %s21, 3
      %p179 = por %p177, %p178
      %p180 = scmp.ne.s32.totalorder %s172, %s175
      %p181 = scmp.eq.s32.totalorder %s21, 0
      %p182 = por %p180, %p181
      %p183 = scmp.ne.s32.totalorder %s172, %s175
      %p184 = scmp.eq.s32.totalorder %s26, 3
      %p185 = por %p183, %p184
      %p186 = scmp.ne.s32.totalorder %s175, %s176
      %p187 = scmp.eq.s32.totalorder %s26, 0
      %p188 = por %p186, %p187
      %p189 = scmp.ne.s32.totalorder %s175, %s176
      %p190 = scmp.eq.s32.totalorder %s27, 3
      %p191 = por %p189, %p190
      %p193 = scmp.ne.s32.totalorder %s176, %s192
      %p194 = scmp.eq.s32.totalorder %s27, 0
      %p195 = por %p193, %p194
      %p196 = scmp.le.s32.totalorder 1, %s21
      %p197 = scmp.lt.s32.totalorder %s21, 5
      %p198 = pnand %p196, %p197
      %p199 = pneg %p198
      // Predicated region
      $region9: #{tpu_custom_call.1} parent=5 // pred_check
        _
      $region10: #{tpu_custom_call.1} parent=5 // pred_check_branch
        %201 = sbr.rel (%p198) target = $region12
      $region11: #{tpu_custom_call.1} parent=5 // pred_region
        %s202 = ssub.s32 %s21, 1
        // Predicated region
        $region13: #{tpu_custom_call.1} parent=11 // pred_check
          %p203 = pneg %p120
        $region14: #{tpu_custom_call.1} parent=11 // pred_check_branch
          %205 = sbr.rel (%p203) target = $region16
        $region15: #{tpu_custom_call.1} parent=11 // pred_region
          _
        $region16: #{tpu_custom_call.1} parent=11 // pred_fallthru
          _
        // Predicated region
        $region17: #{tpu_custom_call.1} parent=11 // pred_check
          %p206 = pneg %p141
        $region18: #{tpu_custom_call.1} parent=11 // pred_check_branch
          %208 = sbr.rel (%p206) target = $region20
        $region19: #{tpu_custom_call.1} parent=11 // pred_region
          _
        $region20: #{tpu_custom_call.1} parent=11 // pred_fallthru
          _
        // Predicated region
        $region21: #{tpu_custom_call.1} parent=11 // pred_check
          %p209 = pneg %p162
        $region22: #{tpu_custom_call.1} parent=11 // pred_check_branch
          %211 = sbr.rel (%p209) target = $region24
        $region23: #{tpu_custom_call.1} parent=11 // pred_region
          _
        $region24: #{tpu_custom_call.1} parent=11 // pred_fallthru
          _
      $region12: #{tpu_custom_call.1} parent=5 // pred_fallthru
        _
      %p212 = scmp.lt.s32.totalorder %s21, 4
      // Predicated region
      $region25: #{tpu_custom_call.1} parent=5 // pred_check
        %p213 = pneg %p212
      $region26: #{tpu_custom_call.1} parent=5 // pred_check_branch
        %215 = sbr.rel (%p213) target = $region28
      $region27: #{tpu_custom_call.1} parent=5 // pred_region
        // Predicated region
        $region29: #{tpu_custom_call.1} parent=27 // pred_check
          %p216 = pneg %p41
        $region30: #{tpu_custom_call.1} parent=27 // pred_check_branch
          %218 = sbr.rel (%p216) target = $region32
        $region31: #{tpu_custom_call.1} parent=27 // pred_region
          %p219 = scmp.lt.s32.totalorder %s21, 3
          %s220 = scalar_select %p219, %s21, 3
          %s221 = smul.addr %s220, 2
          %s222 = scalar_lea.vmem %s0, %s221
        $region32: #{tpu_custom_call.1} parent=27 // pred_fallthru
          _
        // Predicated region
        $region33: #{tpu_custom_call.1} parent=27 // pred_check
          %p223 = pneg %p67
        $region34: #{tpu_custom_call.1} parent=27 // pred_check_branch
          %225 = sbr.rel (%p223) target = $region36
        $region35: #{tpu_custom_call.1} parent=27 // pred_region
          %s226 = sand.u32 %s57, 1
          %s227 = scalar_lea.sflag [#allocation3], %s226
          %s228 = sand.u32 %s57, 1
          %s229 = smul.addr %s228, 8
          %s230 = scalar_lea.vmem [#allocation2], %s229
          %232 = vsyncadd %s227, 0
          %s233 = smul.addr %s21, 8
          %s234 = scalar_lea.hbm %s1, %s233
          %s236 = sshll.u32 %s234, 4
          %s237 = int_to_ptr.hbm [resolvable:$true] %s236
          %s238 = sshll.u32 %s230, 4
          %s239 = int_to_ptr.vmem [resolvable:$true] %s238
          %241 = dma.hbm_to_vmem [thread:$0]  %s237, 128, %s239, %s227
        $region36: #{tpu_custom_call.1} parent=27 // pred_fallthru
          _
        // Predicated region
        $region37: #{tpu_custom_call.1} parent=27 // pred_check
          %p242 = pneg %p93
        $region38: #{tpu_custom_call.1} parent=27 // pred_check_branch
          %244 = sbr.rel (%p242) target = $region40
        $region39: #{tpu_custom_call.1} parent=27 // pred_region
          %s245 = sand.u32 %s83, 1
          %s246 = scalar_lea.sflag [#allocation6], %s245
          %s247 = sand.u32 %s83, 1
          %s248 = smul.addr %s247, 8
          %s249 = scalar_lea.vmem [#allocation5], %s248
          %251 = vsyncadd %s246, 0
          %s252 = smul.addr %s21, 8
          %s253 = scalar_lea.hbm %s2, %s252
          %s255 = sshll.u32 %s253, 4
          %s256 = int_to_ptr.hbm [resolvable:$true] %s255
          %s257 = sshll.u32 %s249, 4
          %s258 = int_to_ptr.vmem [resolvable:$true] %s257
          %260 = dma.hbm_to_vmem [thread:$0]  %s256, 128, %s258, %s246
        $region40: #{tpu_custom_call.1} parent=27 // pred_fallthru
          _
      $region28: #{tpu_custom_call.1} parent=5 // pred_fallthru
        _
      %p261 = scmp.le.s32.totalorder 1, %s21
      %p262 = scmp.lt.s32.totalorder %s21, 5
      %p263 = pnand %p261, %p262
      %p264 = pneg %p263
      // Predicated region
      $region41: #{tpu_custom_call.1} parent=5 // pred_check
        _
      $region42: #{tpu_custom_call.1} parent=5 // pred_check_branch
        %266 = sbr.rel (%p263) target = $region44
      $region43: #{tpu_custom_call.1} parent=5 // pred_region
        %s267 = ssub.s32 %s21, 1
        %s268 = sand.u32 %s60, 1
        %s269 = scalar_lea.sflag [#allocation3], %s268
        %s270 = sand.u32 %s60, 1
        %s271 = smul.addr %s270, 8
        %s272 = scalar_lea.vmem [#allocation2], %s271
        // Predicated region
        $region45: #{tpu_custom_call.1} parent=43 // pred_check
          %p273 = pneg %p73
        $region46: #{tpu_custom_call.1} parent=43 // pred_check_branch
          %275 = sbr.rel (%p273) target = $region48
        $region47: #{tpu_custom_call.1} parent=43 // pred_region
          %277 = dma.done %s269, 128
        $region48: #{tpu_custom_call.1} parent=43 // pred_fallthru
          _
        %s278 = sand.u32 %s86, 1
        %s279 = scalar_lea.sflag [#allocation6], %s278
        %s280 = sand.u32 %s86, 1
        %s281 = smul.addr %s280, 8
        %s282 = scalar_lea.vmem [#allocation5], %s281
        // Predicated region
        $region49: #{tpu_custom_call.1} parent=43 // pred_check
          %p283 = pneg %p99
        $region50: #{tpu_custom_call.1} parent=43 // pred_check_branch
          %285 = sbr.rel (%p283) target = $region52
        $region51: #{tpu_custom_call.1} parent=43 // pred_region
          %287 = dma.done %s279, 128
        $region52: #{tpu_custom_call.1} parent=43 // pred_fallthru
          _
        %p288 = scmp.lt.s32.totalorder %s26, 3
        %s289 = scalar_select %p288, %s26, 3
        %s290 = smul.addr %s289, 2
        %s291 = scalar_lea.vmem %s0, %s290
        %p292 = pneg %p47
        %p293 = pneg %p44
        %s294 = sand.u32 %s60, 1
        %s295 = scalar_lea.sflag [#allocation3], %s294
        %s296 = sand.u32 %s60, 1
        %s297 = smul.addr %s296, 8
        %s298 = scalar_lea.vmem [#allocation2], %s297
        %p299 = pneg %p73
        %p300 = pneg %p70
        %s301 = sand.u32 %s86, 1
        %s302 = scalar_lea.sflag [#allocation6], %s301
        %s303 = sand.u32 %s86, 1
        %s304 = smul.addr %s303, 8
        %s305 = scalar_lea.vmem [#allocation5], %s304
        %p306 = pneg %p99
        %p307 = pneg %p96
        %p308 = pneg %p120
        %p309 = pneg %p117
        %p310 = pneg %p141
        %p311 = pneg %p138
        %p312 = pneg %p162
        %p313 = pneg %p159
        %p314 = pneg %p188
        %p315 = pneg %p185
        %s316 = sand.u32 %s175, 1
        %s317 = scalar_lea.sflag [#allocation4], %s316
        %s318 = sand.u32 %s175, 1
        %s319 = smul.addr %s318, 8
        %s320 = scalar_lea.vmem [#allocation7], %s319
        %p321 = scmp.lt.s32.totalorder %s26, 3
        %s322 = scalar_select %p321, %s26, 3
        %s323 = smul.addr %s322, 2
        %s324 = scalar_lea.vmem %s0, %s323
        %v326 = vlaneseq
        %v327 = vshrl.u32 %v326, 7
        %v328 = vadd.s32 %v327, 8
        %v329 = vld [vmem:[%s3] sm:$0xf]
        %v330 = vld [vmem:[%s4] sm:$0xf]
        %v331 = vld [vmem:[%s5] sm:$0xff]
        %v332 = vld [vmem:[%s324] sm:$0x3]
        %v333 = vld [vmem:[%s272] sm:$0xff]
        %v334 = vld [vmem:[%s282] sm:$0xff]
        %v335 = vperm.slane %v334, 0
        %vm336 = vcmp.eq.s32.totalorder %v327, %v335
        %vm337 = vcmp.eq.s32.totalorder %v328, %v335
        %v338 = vsel %vm336, 1, 0
        %v339 = vsel %vm337, 1, 0
        %v340 = vcvt.s32.f32 %v338
        %v341 = vcvt.s32.f32 %v339
        %v342 = vpack.c.bf16 %v340, %v340
        %v343 = vpack.c.bf16 %v341, %v341
        %v344 = vperm.slane %v333, 0
        %vm345 = vcmp.eq.s32.totalorder %v327, %v344
        %vm346 = vcmp.eq.s32.totalorder %v328, %v344
        %v347 = vsel %vm345, 1, 0
        %v348 = vsel %vm346, 1, 0
        %v349 = vcvt.s32.f32 %v347
        %v350 = vcvt.s32.f32 %v348
        %v351 = vpack.c.bf16 %v349, %v349
        %v352 = vpack.c.bf16 %v350, %v350
        %v353 = vunpack.c.l.bf16 %v342
        %v354 = vunpack.c.l.bf16 %v343
        %v355 = vunpack.c.l.bf16 %v351
        %v356 = vunpack.c.l.bf16 %v352
        %v357 = vsub.f32 %v353, %v355
        %v358 = vsub.f32 %v354, %v356
        %v359 = vpack.c.bf16 %v358, %v357
        %vm360 = vcmask 130048
        %v362 = vsel %vm360, %v332, 0
        %364 = vmatpush.bf16.msra.mxu0 0
        %365 = vmatpush.bf16.msra.mxu0 0
        %366 = vmatpush.bf16.msra.mxu0 0
        %367 = vmatpush.bf16.msra.mxu0 0
        %368 = vmatpush.bf16.msra.mxu0 0
        %369 = vmatpush.bf16.msra.mxu0 0
        %370 = vmatpush.bf16.msra.mxu0 0
        %371 = vmatpush.bf16.msra.mxu0 %v359
        %372 = vmatmul.bf16.gmra.mxu0 %v362
        %v373 = vpop.f32.mrf.mxu0
        %v374 = vadd.f32 0.0, %v373
        %v375 = vpop.f32.mrf.mxu0
        %376 = vdwg.mxu0
        %v377 = vperm.slane %v334, 1
        %vm378 = vcmp.eq.s32.totalorder %v327, %v377
        %vm379 = vcmp.eq.s32.totalorder %v328, %v377
        %v380 = vsel %vm378, 1, 0
        %v381 = vsel %vm379, 1, 0
        %v382 = vcvt.s32.f32 %v380
        %v383 = vcvt.s32.f32 %v381
        %v384 = vpack.c.bf16 %v382, %v382
        %v385 = vpack.c.bf16 %v383, %v383
        %v386 = vperm.slane %v333, 1
        %vm387 = vcmp.eq.s32.totalorder %v327, %v386
        %vm388 = vcmp.eq.s32.totalorder %v328, %v386
        %v389 = vsel %vm387, 1, 0
        %v390 = vsel %vm388, 1, 0
        %v391 = vcvt.s32.f32 %v389
        %v392 = vcvt.s32.f32 %v390
        %v393 = vpack.c.bf16 %v391, %v391
        %v394 = vpack.c.bf16 %v392, %v392
        %v395 = vunpack.c.l.bf16 %v384
        %v396 = vunpack.c.l.bf16 %v385
        %v397 = vunpack.c.l.bf16 %v393
        %v398 = vunpack.c.l.bf16 %v394
        %v399 = vsub.f32 %v395, %v397
        %v400 = vsub.f32 %v396, %v398
        %v401 = vpack.c.bf16 %v400, %v399
        %402 = vmatpush.bf16.msra.mxu0 0
        %403 = vmatpush.bf16.msra.mxu0 0
        %404 = vmatpush.bf16.msra.mxu0 0
        %405 = vmatpush.bf16.msra.mxu0 0
        %406 = vmatpush.bf16.msra.mxu0 0
        %407 = vmatpush.bf16.msra.mxu0 0
        %408 = vmatpush.bf16.msra.mxu0 0
        %409 = vmatpush.bf16.msra.mxu0 %v401
        %410 = vmatmul.bf16.gmra.mxu0 %v362
        %v411 = vpop.f32.mrf.mxu0
        %v412 = vadd.f32 0.0, %v411
        %v413 = vpop.f32.mrf.mxu0
        %414 = vdwg.mxu0
        %v415 = vmax.f32 %v374, %v412
        %v416 = vperm.slane %v334, 2
        %vm417 = vcmp.eq.s32.totalorder %v327, %v416
        %vm418 = vcmp.eq.s32.totalorder %v328, %v416
        %v419 = vsel %vm417, 1, 0
        %v420 = vsel %vm418, 1, 0
        %v421 = vcvt.s32.f32 %v419
        %v422 = vcvt.s32.f32 %v420
        %v423 = vpack.c.bf16 %v421, %v421
        %v424 = vpack.c.bf16 %v422, %v422
        %v425 = vperm.slane %v333, 2
        %vm426 = vcmp.eq.s32.totalorder %v327, %v425
        %vm427 = vcmp.eq.s32.totalorder %v328, %v425
        %v428 = vsel %vm426, 1, 0
        %v429 = vsel %vm427, 1, 0
        %v430 = vcvt.s32.f32 %v428
        %v431 = vcvt.s32.f32 %v429
        %v432 = vpack.c.bf16 %v430, %v430
        %v433 = vpack.c.bf16 %v431, %v431
        %v434 = vunpack.c.l.bf16 %v423
        %v435 = vunpack.c.l.bf16 %v424
        %v436 = vunpack.c.l.bf16 %v432
        %v437 = vunpack.c.l.bf16 %v433
        %v438 = vsub.f32 %v434, %v436
        %v439 = vsub.f32 %v435, %v437
        %v440 = vpack.c.bf16 %v439, %v438
        %441 = vmatpush.bf16.msra.mxu0 0
        %442 = vmatpush.bf16.msra.mxu0 0
        %443 = vmatpush.bf16.msra.mxu0 0
        %444 = vmatpush.bf16.msra.mxu0 0
        %445 = vmatpush.bf16.msra.mxu0 0
        %446 = vmatpush.bf16.msra.mxu0 0
        %447 = vmatpush.bf16.msra.mxu0 0
        %448 = vmatpush.bf16.msra.mxu0 %v440
        %449 = vmatmul.bf16.gmra.mxu0 %v362
        %v450 = vpop.f32.mrf.mxu0
        %v451 = vadd.f32 0.0, %v450
        %v452 = vpop.f32.mrf.mxu0
        %453 = vdwg.mxu0
        %v454 = vmax.f32 %v415, %v451
        %v455 = vperm.slane %v334, 3
        %vm456 = vcmp.eq.s32.totalorder %v327, %v455
        %vm457 = vcmp.eq.s32.totalorder %v328, %v455
        %v458 = vsel %vm456, 1, 0
        %v459 = vsel %vm457, 1, 0
        %v460 = vcvt.s32.f32 %v458
        %v461 = vcvt.s32.f32 %v459
        %v462 = vpack.c.bf16 %v460, %v460
        %v463 = vpack.c.bf16 %v461, %v461
        %v464 = vperm.slane %v333, 3
        %vm465 = vcmp.eq.s32.totalorder %v327, %v464
        %vm466 = vcmp.eq.s32.totalorder %v328, %v464
        %v467 = vsel %vm465, 1, 0
        %v468 = vsel %vm466, 1, 0
        %v469 = vcvt.s32.f32 %v467
        %v470 = vcvt.s32.f32 %v468
        %v471 = vpack.c.bf16 %v469, %v469
        %v472 = vpack.c.bf16 %v470, %v470
        %v473 = vunpack.c.l.bf16 %v462
        %v474 = vunpack.c.l.bf16 %v463
        %v475 = vunpack.c.l.bf16 %v471
        %v476 = vunpack.c.l.bf16 %v472
        %v477 = vsub.f32 %v473, %v475
        %v478 = vsub.f32 %v474, %v476
        %v479 = vpack.c.bf16 %v478, %v477
        %480 = vmatpush.bf16.msra.mxu0 0
        %481 = vmatpush.bf16.msra.mxu0 0
        %482 = vmatpush.bf16.msra.mxu0 0
        %483 = vmatpush.bf16.msra.mxu0 0
        %484 = vmatpush.bf16.msra.mxu0 0
        %485 = vmatpush.bf16.msra.mxu0 0
        %486 = vmatpush.bf16.msra.mxu0 0
        %487 = vmatpush.bf16.msra.mxu0 %v479
        %488 = vmatmul.bf16.gmra.mxu0 %v362
        %v489 = vpop.f32.mrf.mxu0
        %v490 = vadd.f32 0.0, %v489
        %v491 = vpop.f32.mrf.mxu0
        %492 = vdwg.mxu0
        %v493 = vmax.f32 %v454, %v490
        %v494 = vperm.slane %v334, 4
        %vm495 = vcmp.eq.s32.totalorder %v327, %v494
        %vm496 = vcmp.eq.s32.totalorder %v328, %v494
        %v497 = vsel %vm495, 1, 0
        %v498 = vsel %vm496, 1, 0
        %v499 = vcvt.s32.f32 %v497
        %v500 = vcvt.s32.f32 %v498
        %v501 = vpack.c.bf16 %v499, %v499
        %v502 = vpack.c.bf16 %v500, %v500
        %v503 = vperm.slane %v333, 4
        %vm504 = vcmp.eq.s32.totalorder %v327, %v503
        %vm505 = vcmp.eq.s32.totalorder %v328, %v503
        %v506 = vsel %vm504, 1, 0
        %v507 = vsel %vm505, 1, 0
        %v508 = vcvt.s32.f32 %v506
        %v509 = vcvt.s32.f32 %v507
        %v510 = vpack.c.bf16 %v508, %v508
        %v511 = vpack.c.bf16 %v509, %v509
        %v512 = vunpack.c.l.bf16 %v501
        %v513 = vunpack.c.l.bf16 %v502
        %v514 = vunpack.c.l.bf16 %v510
        %v515 = vunpack.c.l.bf16 %v511
        %v516 = vsub.f32 %v512, %v514
        %v517 = vsub.f32 %v513, %v515
        %v518 = vpack.c.bf16 %v517, %v516
        %519 = vmatpush.bf16.msra.mxu0 0
        %520 = vmatpush.bf16.msra.mxu0 0
        %521 = vmatpush.bf16.msra.mxu0 0
        %522 = vmatpush.bf16.msra.mxu0 0
        %523 = vmatpush.bf16.msra.mxu0 0
        %524 = vmatpush.bf16.msra.mxu0 0
        %525 = vmatpush.bf16.msra.mxu0 0
        %526 = vmatpush.bf16.msra.mxu0 %v518
        %527 = vmatmul.bf16.gmra.mxu0 %v362
        %v528 = vpop.f32.mrf.mxu0
        %v529 = vadd.f32 0.0, %v528
        %v530 = vpop.f32.mrf.mxu0
        %531 = vdwg.mxu0
        %v532 = vmax.f32 %v493, %v529
        %v533 = vperm.slane %v334, 5
        %vm534 = vcmp.eq.s32.totalorder %v327, %v533
        %vm535 = vcmp.eq.s32.totalorder %v328, %v533
        %v536 = vsel %vm534, 1, 0
        %v537 = vsel %vm535, 1, 0
        %v538 = vcvt.s32.f32 %v536
        %v539 = vcvt.s32.f32 %v537
        %v540 = vpack.c.bf16 %v538, %v538
        %v541 = vpack.c.bf16 %v539, %v539
        %v542 = vperm.slane %v333, 5
        %vm543 = vcmp.eq.s32.totalorder %v327, %v542
        %vm544 = vcmp.eq.s32.totalorder %v328, %v542
        %v545 = vsel %vm543, 1, 0
        %v546 = vsel %vm544, 1, 0
        %v547 = vcvt.s32.f32 %v545
        %v548 = vcvt.s32.f32 %v546
        %v549 = vpack.c.bf16 %v547, %v547
        %v550 = vpack.c.bf16 %v548, %v548
        %v551 = vunpack.c.l.bf16 %v540
        %v552 = vunpack.c.l.bf16 %v541
        %v553 = vunpack.c.l.bf16 %v549
        %v554 = vunpack.c.l.bf16 %v550
        %v555 = vsub.f32 %v551, %v553
        %v556 = vsub.f32 %v552, %v554
        %v557 = vpack.c.bf16 %v556, %v555
        %558 = vmatpush.bf16.msra.mxu0 0
        %559 = vmatpush.bf16.msra.mxu0 0
        %560 = vmatpush.bf16.msra.mxu0 0
        %561 = vmatpush.bf16.msra.mxu0 0
        %562 = vmatpush.bf16.msra.mxu0 0
        %563 = vmatpush.bf16.msra.mxu0 0
        %564 = vmatpush.bf16.msra.mxu0 0
        %565 = vmatpush.bf16.msra.mxu0 %v557
        %566 = vmatmul.bf16.gmra.mxu0 %v362
        %v567 = vpop.f32.mrf.mxu0
        %v568 = vadd.f32 0.0, %v567
        %v569 = vpop.f32.mrf.mxu0
        %570 = vdwg.mxu0
        %v571 = vmax.f32 %v532, %v568
        %v572 = vperm.slane %v334, 6
        %vm573 = vcmp.eq.s32.totalorder %v327, %v572
        %vm574 = vcmp.eq.s32.totalorder %v328, %v572
        %v575 = vsel %vm573, 1, 0
        %v576 = vsel %vm574, 1, 0
        %v577 = vcvt.s32.f32 %v575
        %v578 = vcvt.s32.f32 %v576
        %v579 = vpack.c.bf16 %v577, %v577
        %v580 = vpack.c.bf16 %v578, %v578
        %v581 = vperm.slane %v333, 6
        %vm582 = vcmp.eq.s32.totalorder %v327, %v581
        %vm583 = vcmp.eq.s32.totalorder %v328, %v581
        %v584 = vsel %vm582, 1, 0
        %v585 = vsel %vm583, 1, 0
        %v586 = vcvt.s32.f32 %v584
        %v587 = vcvt.s32.f32 %v585
        %v588 = vpack.c.bf16 %v586, %v586
        %v589 = vpack.c.bf16 %v587, %v587
        %v590 = vunpack.c.l.bf16 %v579
        %v591 = vunpack.c.l.bf16 %v580
        %v592 = vunpack.c.l.bf16 %v588
        %v593 = vunpack.c.l.bf16 %v589
        %v594 = vsub.f32 %v590, %v592
        %v595 = vsub.f32 %v591, %v593
        %v596 = vpack.c.bf16 %v595, %v594
        %597 = vmatpush.bf16.msra.mxu0 0
        %598 = vmatpush.bf16.msra.mxu0 0
        %599 = vmatpush.bf16.msra.mxu0 0
        %600 = vmatpush.bf16.msra.mxu0 0
        %601 = vmatpush.bf16.msra.mxu0 0
        %602 = vmatpush.bf16.msra.mxu0 0
        %603 = vmatpush.bf16.msra.mxu0 0
        %604 = vmatpush.bf16.msra.mxu0 %v596
        %605 = vmatmul.bf16.gmra.mxu0 %v362
        %v606 = vpop.f32.mrf.mxu0
        %v607 = vadd.f32 0.0, %v606
        %v608 = vpop.f32.mrf.mxu0
        %609 = vdwg.mxu0
        %v610 = vmax.f32 %v571, %v607
        %v611 = vperm.slane %v334, 7
        %vm612 = vcmp.eq.s32.totalorder %v327, %v611
        %vm613 = vcmp.eq.s32.totalorder %v328, %v611
        %v614 = vsel %vm612, 1, 0
        %v615 = vsel %vm613, 1, 0
        %v616 = vcvt.s32.f32 %v614
        %v617 = vcvt.s32.f32 %v615
        %v618 = vpack.c.bf16 %v616, %v616
        %v619 = vpack.c.bf16 %v617, %v617
        %v620 = vperm.slane %v333, 7
        %vm621 = vcmp.eq.s32.totalorder %v327, %v620
        %vm622 = vcmp.eq.s32.totalorder %v328, %v620
        %v623 = vsel %vm621, 1, 0
        %v624 = vsel %vm622, 1, 0
        %v625 = vcvt.s32.f32 %v623
        %v626 = vcvt.s32.f32 %v624
        %v627 = vpack.c.bf16 %v625, %v625
        %v628 = vpack.c.bf16 %v626, %v626
        %v629 = vunpack.c.l.bf16 %v618
        %v630 = vunpack.c.l.bf16 %v619
        %v631 = vunpack.c.l.bf16 %v627
        %v632 = vunpack.c.l.bf16 %v628
        %v633 = vsub.f32 %v629, %v631
        %v634 = vsub.f32 %v630, %v632
        %v635 = vpack.c.bf16 %v634, %v633
        %636 = vmatpush.bf16.msra.mxu0 0
        %637 = vmatpush.bf16.msra.mxu0 0
        %638 = vmatpush.bf16.msra.mxu0 0
        %639 = vmatpush.bf16.msra.mxu0 0
        %640 = vmatpush.bf16.msra.mxu0 0
        %641 = vmatpush.bf16.msra.mxu0 0
        %642 = vmatpush.bf16.msra.mxu0 0
        %643 = vmatpush.bf16.msra.mxu0 %v635
        %644 = vmatmul.bf16.gmra.mxu0 %v362
        %v645 = vpop.f32.mrf.mxu0
        %v646 = vadd.f32 0.0, %v645
        %v647 = vpop.f32.mrf.mxu0
        %648 = vdwg.mxu0
        %v649 = vmax.f32 %v610, %v646
        %v650 = vpack.c.bf16 %v649, %v649
        %vm651 = vcmask 31744
        %v653 = vsel %vm651, %v330, 0
        %vm655 = vcmask 1041408
        %v657 = vsel %vm655, %v650, 0
        %659 = vmatpush.bf16.msra.mxu0 0
        %660 = vmatpush.bf16.msra.mxu0 0
        %661 = vmatpush.bf16.msra.mxu0 0
        %662 = vmatpush.bf16.msra.mxu0 0
        %663 = vmatpush.bf16.msra.mxu0 0
        %664 = vmatpush.bf16.msra.mxu0 0
        %665 = vmatpush.bf16.msra.mxu0 0
        %666 = vmatpush.bf16.msra.mxu0 %v657
        %667 = vmatmul.bf16.gmra.mxu0 %v653
        %v668 = vpop.f32.mrf.mxu0
        %v669 = vadd.f32 0.0, %v668
        %v670 = vpop.f32.mrf.mxu0
        %671 = vdwg.mxu0
        %v673 = vsel %vm651, %v329, 0
        %v675 = vsel %vm655, %v332, 0
        %677 = vmatpush.bf16.msra.mxu0 0
        %678 = vmatpush.bf16.msra.mxu0 0
        %679 = vmatpush.bf16.msra.mxu0 0
        %680 = vmatpush.bf16.msra.mxu0 0
        %681 = vmatpush.bf16.msra.mxu0 0
        %682 = vmatpush.bf16.msra.mxu0 0
        %683 = vmatpush.bf16.msra.mxu0 0
        %684 = vmatpush.bf16.msra.mxu0 %v675
        %685 = vmatmul.bf16.gmra.mxu0 %v673
        %v686 = vpop.f32.mrf.mxu0
        %v687 = vadd.f32 %v669, %v686
        %v688 = vpop.f32.mrf.mxu0
        %689 = vdwg.mxu0
        %691 = vset.pattern.permute.xlu0 0
        %692 = vperm.xlu0 %691, %v331
        %v693 = vpop.permute.xlu0 %692
        %v695 = vadd.f32 %v687, %v693
        %v696 = vmax.f32 %v695, 0.0
        %697 = vst.msk [vmem:[%s320] sm:$0xff] %vm360, %v696
        %s698 = sand.u32 %s175, 1
        %s699 = scalar_lea.sflag [#allocation4], %s698
        %s700 = sand.u32 %s175, 1
        %s701 = smul.addr %s700, 8
        %s702 = scalar_lea.vmem [#allocation7], %s701
        // Predicated region
        $region53: #{tpu_custom_call.1} parent=43 // pred_check
          %p703 = pneg %p185
        $region54: #{tpu_custom_call.1} parent=43 // pred_check_branch
          %705 = sbr.rel (%p703) target = $region56
        $region55: #{tpu_custom_call.1} parent=43 // pred_region
          %707 = vsyncadd %s699, 0
          %s708 = smul.addr %s26, 8
          %s709 = scalar_lea.hbm %s6, %s708
          %s711 = sshll.u32 %s702, 4
          %s712 = int_to_ptr.vmem [resolvable:$true] %s711
          %s713 = sshll.u32 %s709, 4
          %s714 = int_to_ptr.hbm [resolvable:$true] %s713
          %716 = dma.vmem_to_hbm [thread:$0]  %s712, 128, %s714, %s699
        $region56: #{tpu_custom_call.1} parent=43 // pred_fallthru
          _
      $region44: #{tpu_custom_call.1} parent=5 // pred_fallthru
        _
      %p717 = scmp.le.s32.totalorder 2, %s21
      // Predicated region
      $region57: #{tpu_custom_call.1} parent=5 // pred_check
        %p718 = pneg %p717
      $region58: #{tpu_custom_call.1} parent=5 // pred_check_branch
        %720 = sbr.rel (%p718) target = $region60
      $region59: #{tpu_custom_call.1} parent=5 // pred_region
        %s721 = ssub.s32 %s21, 2
        // Predicated region
        $region61: #{tpu_custom_call.1} parent=59 // pred_check
          %p722 = pneg %p191
        $region62: #{tpu_custom_call.1} parent=59 // pred_check_branch
          %724 = sbr.rel (%p722) target = $region64
        $region63: #{tpu_custom_call.1} parent=59 // pred_region
          %s725 = sand.u32 %s176, 1
          %s726 = scalar_lea.sflag [#allocation4], %s725
          %s727 = sand.u32 %s176, 1
          %s728 = smul.addr %s727, 8
          %s729 = scalar_lea.vmem [#allocation7], %s728
          %731 = dma.done %s726, 128
        $region64: #{tpu_custom_call.1} parent=59 // pred_fallthru
          _
      $region60: #{tpu_custom_call.1} parent=5 // pred_fallthru
        _
    $region6: #{tpu_custom_call.1} parent=1 // loop_footer
      %s25 = sadd.s32 1, %s21
    $region7: #{tpu_custom_call.1} parent=1 // loop_footer_branch
      %20 = sbr.rel target = $region3
    $region8: #{tpu_custom_call.1} parent=1 // loop_exit
      _
    %732 = vsyncpa [#allocation3], 1
    %s733 = scalar_lea.sflag [#allocation3], 1
    %734 = vsyncpa %s733, 1
    %735 = vsyncpa [#allocation6], 1
    %s736 = scalar_lea.sflag [#allocation6], 1
    %737 = vsyncpa %s736, 1
    %738 = vsyncpa [#allocation4], 1
    %s739 = scalar_lea.sflag [#allocation4], 1
    %740 = vsyncpa %s739, 1

</llo_original>
